<compile_context>
chip_gen: v6e
topology: v6e:2x2x1
jax: 0.10.0
libtpu: 0.0.40
codegen_flags: <defaults>
</compile_context>

<pallas_src>
import functools

import jax
import jax.numpy as jnp
from jax.experimental import pallas as pl
from jax.experimental.pallas import tpu as pltpu


_TILE_M = 1024                    # im2col rows per block (stride-2 fallback path)
_FWARP_TILE = 512                 # dst / src pixels per fwarp block
_VMEM_LIMIT = 32 * 1024 * 1024    # raise v5e scoped default (16 MiB); safe on v6e/v7x


def _round_up(x, m):
    return (x + m - 1) // m * m


# ----------------------------------------------------------------------------
# Pallas kernels
# ----------------------------------------------------------------------------
def _conv3x3_s1_kernel(alpha_ref, x0_ref, x1_ref, x2_ref, w_ref, b_ref, o_ref):
    """Fused 3x3 stride-1 conv, one output row per grid step.

    x{dy}_ref: (1, 1, Wp, Cin) bf16 = padded input row (oy + dy), delivered via
               three row-shifted BlockSpecs over the same HBM array (no im2col
               slab in HBM).
    w_ref:     (3, 3, Cin, Cout) bf16 (resident, constant index map).
    b_ref:     (1, Cout) f32.   o_ref: (1, 1, Wo, Cout) bf16.
    alpha_ref: SMEM f32[2] = [pre_alpha, post_alpha]; alpha == 1.0 -> identity.
    """
    wo = o_ref.shape[2]
    cout = o_ref.shape[3]
    pre = alpha_ref[0]
    post = alpha_ref[1]

    acc = jnp.zeros((wo, cout), jnp.float32)
    for dy, xr in enumerate((x0_ref, x1_ref, x2_ref)):
        row = xr[0, 0]                                    # (Wp, Cin) bf16
        row = jnp.where(row >= 0, row, pre.astype(row.dtype) * row)  # pre-PReLU
        for dx in range(3):
            a = row[dx:dx + wo, :]                        # (Wo, Cin) static slice
            acc += jnp.dot(a, w_ref[dy, dx],
                           preferred_element_type=jnp.float32)

    y = acc + b_ref[...]
    y = jnp.where(y >= 0.0, y, post * y)                  # post-PReLU
    o_ref[0, 0] = y.astype(o_ref.dtype)


def _conv_mm_kernel(alpha_ref, a_ref, w_ref, b_ref, o_ref):
    """Single full-K im2col matmul block with fused pre/post PReLU (stride-2 path)."""
    a = a_ref[...]                                        # (tm, K) bf16
    pre = alpha_ref[0].astype(a.dtype)
    a = jnp.where(a >= 0, a, pre * a)
    y = jnp.dot(a, w_ref[...], preferred_element_type=jnp.float32) + b_ref[...]
    post = alpha_ref[1]
    o_ref[...] = jnp.where(y >= 0.0, y, post * y).astype(o_ref.dtype)


def _fwarp_kernel(txty_ref, gx_ref, gy_ref, valsT_ref, img_ref, nrm_ref, acc_ref):
    """Forward (splatting) warp, tiled over (batch, dst tile, src tile).

    txty_ref: (1, ts, 2) f32 host-precomputed warped source coords (x + u, y + v).
    gx_ref/gy_ref: (1, tq) f32 lane-dense destination pixel coords.
    valsT_ref: (1, C+1, ts) bf16 (last row = ones -> splat norm).
    img_ref: (1, C, tq) bf16, nrm_ref: (1, 1, tq) f32, acc_ref: (C+1, tq) f32.
    """
    sk = pl.program_id(2)

    @pl.when(sk == 0)
    def _init():
        acc_ref[...] = jnp.zeros_like(acc_ref)

    tx = txty_ref[0, :, 0:1]                              # (ts, 1) f32
    ty = txty_ref[0, :, 1:2]
    dx = gx_ref[...]                                      # (1, tq) f32
    dy = gy_ref[...]
    wgt = jnp.maximum(0.0, 1.0 - jnp.abs(tx - dx)) * \
          jnp.maximum(0.0, 1.0 - jnp.abs(ty - dy))        # (ts, tq) f32

    acc_ref[...] += jnp.dot(valsT_ref[0], wgt.astype(jnp.bfloat16),
                            preferred_element_type=jnp.float32)

    @pl.when(sk == pl.num_programs(2) - 1)
    def _finalize():
        acc = acc_ref[...]
        cp = acc.shape[0]
        warped = acc[:cp - 1, :]                          # (C, tq)
        nrm = acc[cp - 1:cp, :]                           # (1, tq)
        inv = pl.reciprocal(jnp.where(nrm > 0.0, nrm, 1.0), approx=True)
        img_ref[...] = (warped * inv)[None].astype(img_ref.dtype)
        nrm_ref[...] = nrm[None]


# ----------------------------------------------------------------------------
# Pallas-backed ops (wrappers)
# ----------------------------------------------------------------------------
def _row_shift_map(dy, b, r):
    return (b, r + dy, 0, 0)


@jax.jit
def conv2d_s1(x, w, b, alphas):
    """Fused 3x3 stride-1 conv (padding=1) with pre/post PReLU, NHWC -> NHWC bf16."""
    n, h, wd, cin = x.shape
    cout, _, kh, kw = w.shape
    ph, pw = kh // 2, kw // 2
    wp = wd + 2 * pw

    xp = jnp.pad(x.astype(jnp.bfloat16), ((0, 0), (ph, ph), (pw, pw), (0, 0)))
    wm = jnp.transpose(w, (2, 3, 1, 0)).astype(jnp.bfloat16)   # (kh, kw, cin, cout)
    bm = b.astype(jnp.float32).reshape(1, cout)

    x_specs = [pl.BlockSpec((1, 1, wp, cin), functools.partial(_row_shift_map, dy))
               for dy in range(kh)]

    out = pl.pallas_call(
        _conv3x3_s1_kernel,
        out_shape=jax.ShapeDtypeStruct((n, h, wd, cout), jnp.bfloat16),
        grid=(n, h),
        in_specs=[pl.BlockSpec(memory_space=pltpu.MemorySpace.SMEM)] + x_specs + [
            pl.BlockSpec((kh, kw, cin, cout), lambda bi, r: (0, 0, 0, 0)),
            pl.BlockSpec((1, cout), lambda bi, r: (0, 0)),
        ],
        out_specs=pl.BlockSpec((1, 1, wd, cout), lambda bi, r: (bi, r, 0, 0)),
        compiler_params=pltpu.CompilerParams(
            dimension_semantics=("parallel", "parallel"),
            vmem_limit_bytes=_VMEM_LIMIT),
    )(alphas, xp, xp, xp, wm, bm)
    return out


@functools.partial(jax.jit, static_argnames=("stride",))
def conv2d_im2col(x, w, b, alphas, stride=2):
    """kxk conv (padding=k//2) via a full-K im2col matmul (used for stride-2 convs)."""
    n, h, wd, cin = x.shape
    cout, _, kh, kw = w.shape
    ph, pw = kh // 2, kw // 2
    ho = (h + 2 * ph - kh) // stride + 1
    wo = (wd + 2 * pw - kw) // stride + 1

    xp = jnp.pad(x.astype(jnp.bfloat16), ((0, 0), (ph, ph), (pw, pw), (0, 0)))
    taps = [xp[:, dy:dy + (ho - 1) * stride + 1:stride,
                  dx:dx + (wo - 1) * stride + 1:stride, :]
            for dy in range(kh) for dx in range(kw)]
    a = jnp.concatenate(taps, axis=-1).reshape(n * ho * wo, kh * kw * cin)
    wm = jnp.transpose(w, (2, 3, 1, 0)).reshape(kh * kw * cin, cout)
    wm = wm.astype(jnp.bfloat16)
    bm = b.astype(jnp.float32).reshape(1, cout)

    m_dim, k_dim = a.shape
    mp = _round_up(m_dim, 8)
    tm = min(_TILE_M, mp)
    # Give the megacore-parallel M axis >=2 blocks when it would collapse (v7x).
    if mp // tm < 2 and mp >= 16:
        tm = _round_up(pl.cdiv(mp, 2), 8)
    mp = _round_up(m_dim, tm)
    if mp != m_dim:
        a = jnp.pad(a, ((0, mp - m_dim), (0, 0)))

    out = pl.pallas_call(
        _conv_mm_kernel,
        out_shape=jax.ShapeDtypeStruct((mp, cout), jnp.bfloat16),
        grid=(mp // tm,),
        in_specs=[
            pl.BlockSpec(memory_space=pltpu.MemorySpace.SMEM),       # alphas
            pl.BlockSpec((tm, k_dim), lambda i: (i, 0)),             # A (full K)
            pl.BlockSpec((k_dim, cout), lambda i: (0, 0)),           # W
            pl.BlockSpec((1, cout), lambda i: (0, 0)),               # bias
        ],
        out_specs=pl.BlockSpec((tm, cout), lambda i: (i, 0)),
        compiler_params=pltpu.CompilerParams(
            dimension_semantics=("parallel",),
            vmem_limit_bytes=_VMEM_LIMIT),
    )(alphas, a, wm, bm)

    return out[:m_dim].reshape(n, ho, wo, cout)


def _conv(x, p, stride=1, pre=1.0, post=1.0):
    alphas = jnp.array([pre, post], jnp.float32)
    kh, kw = p["w"].shape[2], p["w"].shape[3]
    if stride == 1 and kh == 3 and kw == 3:
        return conv2d_s1(x, p["w"], p["b"], alphas)
    return conv2d_im2col(x, p["w"], p["b"], alphas, stride=stride)


@jax.jit
def fwarp(im, flow):
    """Forward (splatting) warp, NHWC image + NCHW flow.

    im: (N, H, W, C), flow: (N, 2, H, W) with (u, v) = (dx, dy).
    Returns (normalised warped image NHWC bf16, norm (N, H, W, 1) f32); the
    `out[norm>0] /= norm[norm>0]` normalisation is fused inside the kernel.
    """
    n, h, w, c = im.shape
    hw = h * w
    tq = min(_FWARP_TILE, _round_up(hw, 128))
    ts = tq
    hwp = _round_up(hw, tq)

    # destination pixel coords, lane-dense (shared across batch)
    gx = (jnp.arange(hw, dtype=jnp.int32) % w).astype(jnp.float32)
    gy = (jnp.arange(hw, dtype=jnp.int32) // w).astype(jnp.float32)
    gxp = jnp.pad(gx, (0, hwp - hw)).reshape(1, hwp)
    gyp = jnp.pad(gy, (0, hwp - hw)).reshape(1, hwp)

    # host-precomputed warped source coords (x + u, y + v)
    flo = jnp.transpose(flow, (0, 2, 3, 1)).reshape(n, hw, 2).astype(jnp.float32)
    txty = flo + jnp.stack([gx, gy], axis=-1)[None]                # (n, hw, 2)
    txty = jnp.pad(txty, ((0, 0), (0, hwp - hw), (0, 0)))

    # value slab transposed so the kernel's output lane dim is the dst tile.
    vals = im.reshape(n, hw, c).astype(jnp.bfloat16)
    vals = jnp.concatenate([vals, jnp.ones((n, hw, 1), jnp.bfloat16)], axis=2)
    valsT = jnp.transpose(vals, (0, 2, 1))                         # (n, C+1, hw)
    valsT = jnp.pad(valsT, ((0, 0), (0, 0), (0, hwp - hw)))        # zero pad src

    img, nrm = pl.pallas_call(
        _fwarp_kernel,
        out_shape=(jax.ShapeDtypeStruct((n, c, hwp), jnp.bfloat16),
                   jax.ShapeDtypeStruct((n, 1, hwp), jnp.float32)),
        grid=(n, hwp // tq, hwp // ts),
        in_specs=[
            pl.BlockSpec((1, ts, 2), lambda b, dq, sk: (b, sk, 0)),      # tx/ty
            pl.BlockSpec((1, tq), lambda b, dq, sk: (0, dq)),            # dst x
            pl.BlockSpec((1, tq), lambda b, dq, sk: (0, dq)),            # dst y
            pl.BlockSpec((1, c + 1, ts), lambda b, dq, sk: (b, 0, sk)),  # valsT
        ],
        out_specs=(
            pl.BlockSpec((1, c, tq), lambda b, dq, sk: (b, 0, dq)),
            pl.BlockSpec((1, 1, tq), lambda b, dq, sk: (b, 0, dq)),
        ),
        scratch_shapes=[pltpu.VMEM((c + 1, tq), jnp.float32)],
        compiler_params=pltpu.CompilerParams(
            dimension_semantics=("parallel", "parallel", "arbitrary"),
            vmem_limit_bytes=_VMEM_LIMIT),
    )(txty, gxp, gyp, valsT)

    warped = jnp.transpose(img[:, :, :hw].reshape(n, c, h, w), (0, 2, 3, 1))
    norm = jnp.transpose(nrm[:, :, :hw].reshape(n, 1, h, w), (0, 2, 3, 1))
    return warped, norm


# ----------------------------------------------------------------------------
# Plain-JAX glue (resizes, parameter init, network wiring)
# ----------------------------------------------------------------------------
def dflow(flo, th, tw):
    """F.interpolate(flo, (th, tw), mode='nearest') + per-channel flow rescale (NCHW)."""
    n, _, h, w = flo.shape
    yi = (jnp.arange(th) * h) // th
    xi = (jnp.arange(tw) * w) // tw
    tmp = flo[:, :, yi, :][:, :, :, xi]
    scale = jnp.array([tw / w, th / h], jnp.float32).reshape(1, 2, 1, 1)
    return tmp * scale


def upsample2x(x):
    # TODO(synk): align_corners convention of the original UpSamplingBlock is
    # unknown; half-pixel bilinear (jax.image.resize) is used here.  NHWC.
    n, h, w, c = x.shape
    return jax.image.resize(x, (n, 2 * h, 2 * w, c), method="bilinear")


def _conv_init(key, cout, cin, k=3):
    kw_, _ = jax.random.split(key)
    fan_in = cin * k * k
    w = jax.random.normal(kw_, (cout, cin, k, k), jnp.float32) / jnp.sqrt(fan_in)
    b = jnp.zeros((cout,), jnp.float32)
    return {"w": w, "b": b}


# ---------------- FeatureExtractor: 3-level conv pyramid (32, 64, 96) --------
def init_feature_extractor(key):
    ks = jax.random.split(key, 6)
    return {
        "c1a": _conv_init(ks[0], 32, 3), "c1b": _conv_init(ks[1], 32, 32),
        "c2a": _conv_init(ks[2], 64, 32), "c2b": _conv_init(ks[3], 64, 64),
        "c3a": _conv_init(ks[4], 96, 64), "c3b": _conv_init(ks[5], 96, 96),
        "alpha": 0.25,  # PReLU default init
    }


def feature_extractor(p, x):
    a = p["alpha"]
    f1 = _conv(x,  p["c1a"], 1, 1.0, a)
    f1 = _conv(f1, p["c1b"], 1, 1.0, a)
    f2 = _conv(f1, p["c2a"], 2, 1.0, a)
    f2 = _conv(f2, p["c2b"], 1, 1.0, a)
    f3 = _conv(f2, p["c3a"], 2, 1.0, a)
    f3 = _conv(f3, p["c3b"], 1, 1.0, a)
    return f1, f2, f3


# ---------------- GridNet(6, 64, 128, 192, 3), grid channels (32, 64, 96) ----
def init_lateral(key, cin, cout):
    k1, k2, k3 = jax.random.split(key, 3)
    p = {"a1": 0.25, "a2": 0.25,
         "c1": _conv_init(k1, cout, cin), "c2": _conv_init(k2, cout, cout)}
    if cin != cout:
        p["skip"] = _conv_init(k3, cout, cin)
    return p


def lateral(p, x):
    # prelu(a1) -> conv1 -> prelu(a2) -> conv2, plus (optional conv) skip,
    # with both PReLUs fused into the conv kernels.
    h = _conv(x, p["c1"], 1, pre=p["a1"], post=p["a2"])
    fx = _conv(h, p["c2"], 1, 1.0, 1.0)
    sx = x
    if "skip" in p:
        sx = _conv(x, p["skip"], 1, 1.0, 1.0)
    return fx + sx


def init_samp(key, cin, cout):
    k1, k2 = jax.random.split(key, 2)
    return {"a1": 0.25, "a2": 0.25,
            "c1": _conv_init(k1, cout, cin), "c2": _conv_init(k2, cout, cout)}


def down(p, x):
    h = _conv(x, p["c1"], 2, pre=p["a1"], post=p["a2"])
    return _conv(h, p["c2"], 1, 1.0, 1.0)


def up(p, x):
    h = _conv(upsample2x(x), p["c1"], 1, pre=p["a1"], post=p["a2"])
    return _conv(h, p["c2"], 1, 1.0, 1.0)


def init_gridnet(key, in0=6, in1=64, in2=128, in3=192, out_ch=3, chs=(32, 64, 96)):
    keys = iter(jax.random.split(key, 64))
    p = {}
    p["init0"] = init_lateral(next(keys), in0, chs[0])
    p["init1"] = init_lateral(next(keys), in1, chs[0])
    p["init2"] = init_lateral(next(keys), in2, chs[1])
    p["init3"] = init_lateral(next(keys), in3, chs[2])
    for r in range(3):
        for c in range(5):
            p[f"lat_{r}_{c}"] = init_lateral(next(keys), chs[r], chs[r])
    for r in range(2):
        for c in range(3):
            p[f"down_{r}_{c}"] = init_samp(next(keys), chs[r], chs[r + 1])
    for r in range(2):
        for c in range(3):
            p[f"up_{r}_{c}"] = init_samp(next(keys), chs[r + 1], chs[r])
    p["final"] = init_lateral(next(keys), chs[0], out_ch)
    return p


def gridnet(p, x, x1, x2, x3):
    s00 = lateral(p["init0"], x) + lateral(p["init1"], x1)
    s10 = down(p["down_0_0"], s00) + lateral(p["init2"], x2)
    s20 = down(p["down_1_0"], s10) + lateral(p["init3"], x3)

    s01 = lateral(p["lat_0_0"], s00)
    s11 = down(p["down_0_1"], s01) + lateral(p["lat_1_0"], s10)
    s21 = down(p["down_1_1"], s11) + lateral(p["lat_2_0"], s20)

    s02 = lateral(p["lat_0_1"], s01)
    s12 = down(p["down_0_2"], s02) + lateral(p["lat_1_1"], s11)
    s22 = down(p["down_1_2"], s12) + lateral(p["lat_2_1"], s21)

    s23 = lateral(p["lat_2_2"], s22)
    s13 = up(p["up_1_0"], s23) + lateral(p["lat_1_2"], s12)
    s03 = up(p["up_0_0"], s13) + lateral(p["lat_0_2"], s02)

    s24 = lateral(p["lat_2_3"], s23)
    s14 = up(p["up_1_1"], s24) + lateral(p["lat_1_3"], s13)
    s04 = up(p["up_0_1"], s14) + lateral(p["lat_0_3"], s03)

    s25 = lateral(p["lat_2_4"], s24)
    s15 = up(p["up_1_2"], s25) + lateral(p["lat_1_4"], s14)
    s05 = up(p["up_0_2"], s15) + lateral(p["lat_0_4"], s04)

    return lateral(p["final"], s05)


# ---------------- AnimeInterp forward ----------------------------------------
def anime_interp_forward(params, I1, I2, F12i, F21i, t):
    # public interface is NCHW (PyTorch layout); internal compute is NHWC bf16.
    N = I1.shape[0]
    I1h = jnp.transpose(I1, (0, 2, 3, 1))
    I2h = jnp.transpose(I2, (0, 2, 3, 1))
    I1o = (I1h - 0.5) / 0.5
    I2o = (I2h - 0.5) / 0.5

    # batched feature extraction: one set of conv pallas_calls for both frames
    f1, f2, f3 = feature_extractor(params["feat"],
                                   jnp.concatenate([I1o, I2o], axis=0))
    feat11, feat21 = f1[:N], f1[N:]
    feat12, feat22 = f2[:N], f2[N:]
    feat13, feat23 = f3[:N], f3[N:]

    # TODO(synk): RFR/RAFT iterative flow refinement not implemented; the
    # initial flows are resized (dflow semantics) to image resolution.
    H, W = I1.shape[2], I1.shape[3]
    F12 = dflow(F12i, H, W)
    F21 = dflow(F21i, H, W)
    F12in, F21in = F12, F21

    F1t = t * F12
    F2t = (1.0 - t) * F21

    F1td = dflow(F1t, feat11.shape[1], feat11.shape[2])
    F2td = dflow(F2t, feat21.shape[1], feat21.shape[2])
    F1tdd = dflow(F1t, feat12.shape[1], feat12.shape[2])
    F2tdd = dflow(F2t, feat22.shape[1], feat22.shape[2])
    F1tddd = dflow(F1t, feat13.shape[1], feat13.shape[2])
    F2tddd = dflow(F2t, feat23.shape[1], feat23.shape[2])

    # forward warps: pairs share resolution/channels, so run each pair as one
    # batched pallas_call (norm>0 normalisation is fused inside the kernel).
    def paired_warp(a, b, fa, fb):
        out, _ = fwarp(jnp.concatenate([a, b], axis=0),
                       jnp.concatenate([fa, fb], axis=0))
        return out[:N], out[N:]

    I1t, I2t = paired_warp(I1h, I2h, F1t, F2t)
    feat1t1, feat2t1 = paired_warp(feat11, feat21, F1td, F2td)
    feat1t2, feat2t2 = paired_warp(feat12, feat22, F1tdd, F2tdd)
    feat1t3, feat2t3 = paired_warp(feat13, feat23, F1tddd, F2tddd)

    It_warp = gridnet(
        params["syn"],
        jnp.concatenate([I1t, I2t], axis=-1),
        jnp.concatenate([feat1t1, feat2t1], axis=-1),
        jnp.concatenate([feat1t2, feat2t2], axis=-1),
        jnp.concatenate([feat1t3, feat2t3], axis=-1),
    )
    It_warp = jnp.transpose(It_warp.astype(jnp.float32), (0, 3, 1, 2))
    return It_warp, F12, F21, F12in, F21in


# ----------------------------------------------------------------------------
if __name__ == "__main__":
    key = jax.random.PRNGKey(0)
    k_param, k1, k2, k3, k4 = jax.random.split(key, 5)
    params = {
        "feat": init_feature_extractor(jax.random.fold_in(k_param, 0)),
        "syn": init_gridnet(jax.random.fold_in(k_param, 1)),
    }

    N, C, H, W = 2, 3, 16, 16
    I1 = jax.random.uniform(k1, (N, C, H, W), jnp.float32)
    I2 = jax.random.uniform(k2, (N, C, H, W), jnp.float32)
    F12i = jax.random.normal(k3, (N, 2, H, W), jnp.float32) * 2.0
    F21i = jax.random.normal(k4, (N, 2, H, W), jnp.float32) * 2.0
    t = 0.5

    out = anime_interp_forward(params, I1, I2, F12i, F21i, t)
    jax.block_until_ready(out)

    It_warp, F12, F21, F12in, F21in = out
    assert It_warp.shape == (N, 3, H, W)
    assert F12.shape == (N, 2, H, W) and F21.shape == (N, 2, H, W)
    assert bool(jnp.all(jnp.isfinite(It_warp)))
    print("KERNEL_OK")
</pallas_src>

<mosaic_0001>
module attributes {stable_mosaic.version = 11 : i64} {
  func.func @_conv3x3_s1_kernel(%arg0: i32, %arg1: i32, %arg2: memref<2xf32, #tpu.memory_space<smem>>, %arg3: memref<1x1x18x3xbf16, #tpu.memory_space<vmem>>, %arg4: memref<1x1x18x3xbf16, #tpu.memory_space<vmem>>, %arg5: memref<1x1x18x3xbf16, #tpu.memory_space<vmem>>, %arg6: memref<3x3x3x32xbf16, #tpu.memory_space<vmem>>, %arg7: memref<1x32xf32, #tpu.memory_space<vmem>>, %arg8: memref<1x1x16x32xbf16, #tpu.memory_space<vmem>>) attributes {dimension_semantics = [#tpu.dimension_semantics<parallel>, #tpu.dimension_semantics<parallel>], iteration_bounds = array<i64: 4, 16>, scalar_prefetch = 0 : i64, scratch_operands = 0 : i64, tpu.core_type = #tpu.core_type<tc>, window_params = [{transform_indices = @transform_0, window_bounds = array<i64: 2>}, {transform_indices = @transform_1, window_bounds = array<i64: 1, 1, 18, 3>}, {transform_indices = @transform_2, window_bounds = array<i64: 1, 1, 18, 3>}, {transform_indices = @transform_3, window_bounds = array<i64: 1, 1, 18, 3>}, {pipeline_mode = #tpu.pipeline_mode<synchronous>, transform_indices = @transform_4, window_bounds = array<i64: 3, 3, 3, 32>}, {pipeline_mode = #tpu.pipeline_mode<synchronous>, transform_indices = @transform_5, window_bounds = array<i64: 1, 32>}, {transform_indices = @transform_6, window_bounds = array<i64: 1, 1, 16, 32>}]} {
    %c0 = arith.constant 0 : index
    %0 = memref.load %arg2[%c0] : memref<2xf32, #tpu.memory_space<smem>>
    %c1 = arith.constant 1 : index
    %1 = memref.load %arg2[%c1] : memref<2xf32, #tpu.memory_space<smem>>
    %cst = arith.constant 0.000000e+00 : f32
    %2 = vector.broadcast %cst : f32 to vector<16x32xf32>
    %c0_0 = arith.constant 0 : index
    %c0_1 = arith.constant 0 : index
    %c0_2 = arith.constant 0 : index
    %c0_3 = arith.constant 0 : index
    %3 = vector.load %arg3[%c0_0, %c0_1, %c0_2, %c0_3] : memref<1x1x18x3xbf16, #tpu.memory_space<vmem>>, vector<1x1x18x3xbf16>
    %4 = vector.shape_cast %3 : vector<1x1x18x3xbf16> to vector<18x3xbf16>
    %cst_4 = arith.constant 0.000000e+00 : bf16
    %5 = vector.broadcast %cst_4 : bf16 to vector<18x3xbf16>
    %6 = arith.cmpf oge, %4, %5 : vector<18x3xbf16>
    %7 = arith.truncf %0 : f32 to bf16
    %8 = vector.broadcast %7 : bf16 to vector<18x3xbf16>
    %9 = arith.mulf %8, %4 : vector<18x3xbf16>
    %10 = arith.select %6, %4, %9 : vector<18x3xi1>, vector<18x3xbf16>
    %11 = vector.extract_strided_slice %10 {offsets = [0, 0], sizes = [16, 3], strides = [1, 1]} : vector<18x3xbf16> to vector<16x3xbf16>
    %c0_5 = arith.constant 0 : index
    %c0_6 = arith.constant 0 : index
    %c0_7 = arith.constant 0 : index
    %c0_8 = arith.constant 0 : index
    %12 = vector.load %arg6[%c0_5, %c0_6, %c0_7, %c0_8] : memref<3x3x3x32xbf16, #tpu.memory_space<vmem>>, vector<1x1x3x32xbf16>
    %13 = vector.shape_cast %12 : vector<1x1x3x32xbf16> to vector<3x32xbf16>
    %cst_9 = arith.constant dense<0.000000e+00> : vector<16x32xf32>
    %14 = tpu.matmul %11, %13, %cst_9 {dimension_numbers = #tpu.dot_dimension_numbers<[1], [0], [0], [1], [0, 0, 1, 1], [], []>} : vector<16x3xbf16>, vector<3x32xbf16>, vector<16x32xf32> -> vector<16x32xf32>
    %15 = arith.addf %2, %14 : vector<16x32xf32>
    %16 = vector.extract_strided_slice %10 {offsets = [1, 0], sizes = [16, 3], strides = [1, 1]} : vector<18x3xbf16> to vector<16x3xbf16>
    %c0_10 = arith.constant 0 : index
    %c1_11 = arith.constant 1 : index
    %c0_12 = arith.constant 0 : index
    %c0_13 = arith.constant 0 : index
    %17 = vector.load %arg6[%c0_10, %c1_11, %c0_12, %c0_13] : memref<3x3x3x32xbf16, #tpu.memory_space<vmem>>, vector<1x1x3x32xbf16>
    %18 = vector.shape_cast %17 : vector<1x1x3x32xbf16> to vector<3x32xbf16>
    %cst_14 = arith.constant dense<0.000000e+00> : vector<16x32xf32>
    %19 = tpu.matmul %16, %18, %cst_14 {dimension_numbers = #tpu.dot_dimension_numbers<[1], [0], [0], [1], [0, 0, 1, 1], [], []>} : vector<16x3xbf16>, vector<3x32xbf16>, vector<16x32xf32> -> vector<16x32xf32>
    %20 = arith.addf %15, %19 : vector<16x32xf32>
    %21 = vector.extract_strided_slice %10 {offsets = [2, 0], sizes = [16, 3], strides = [1, 1]} : vector<18x3xbf16> to vector<16x3xbf16>
    %c0_15 = arith.constant 0 : index
    %c2 = arith.constant 2 : index
    %c0_16 = arith.constant 0 : index
    %c0_17 = arith.constant 0 : index
    %22 = vector.load %arg6[%c0_15, %c2, %c0_16, %c0_17] : memref<3x3x3x32xbf16, #tpu.memory_space<vmem>>, vector<1x1x3x32xbf16>
    %23 = vector.shape_cast %22 : vector<1x1x3x32xbf16> to vector<3x32xbf16>
    %cst_18 = arith.constant dense<0.000000e+00> : vector<16x32xf32>
    %24 = tpu.matmul %21, %23, %cst_18 {dimension_numbers = #tpu.dot_dimension_numbers<[1], [0], [0], [1], [0, 0, 1, 1], [], []>} : vector<16x3xbf16>, vector<3x32xbf16>, vector<16x32xf32> -> vector<16x32xf32>
    %25 = arith.addf %20, %24 : vector<16x32xf32>
    %c0_19 = arith.constant 0 : index
    %c0_20 = arith.constant 0 : index
    %c0_21 = arith.constant 0 : index
    %c0_22 = arith.constant 0 : index
    %26 = vector.load %arg4[%c0_19, %c0_20, %c0_21, %c0_22] : memref<1x1x18x3xbf16, #tpu.memory_space<vmem>>, vector<1x1x18x3xbf16>
    %27 = vector.shape_cast %26 : vector<1x1x18x3xbf16> to vector<18x3xbf16>
    %cst_23 = arith.constant 0.000000e+00 : bf16
    %28 = vector.broadcast %cst_23 : bf16 to vector<18x3xbf16>
    %29 = arith.cmpf oge, %27, %28 : vector<18x3xbf16>
    %30 = arith.truncf %0 : f32 to bf16
    %31 = vector.broadcast %30 : bf16 to vector<18x3xbf16>
    %32 = arith.mulf %31, %27 : vector<18x3xbf16>
    %33 = arith.select %29, %27, %32 : vector<18x3xi1>, vector<18x3xbf16>
    %34 = vector.extract_strided_slice %33 {offsets = [0, 0], sizes = [16, 3], strides = [1, 1]} : vector<18x3xbf16> to vector<16x3xbf16>
    %c1_24 = arith.constant 1 : index
    %c0_25 = arith.constant 0 : index
    %c0_26 = arith.constant 0 : index
    %c0_27 = arith.constant 0 : index
    %35 = vector.load %arg6[%c1_24, %c0_25, %c0_26, %c0_27] : memref<3x3x3x32xbf16, #tpu.memory_space<vmem>>, vector<1x1x3x32xbf16>
    %36 = vector.shape_cast %35 : vector<1x1x3x32xbf16> to vector<3x32xbf16>
    %cst_28 = arith.constant dense<0.000000e+00> : vector<16x32xf32>
    %37 = tpu.matmul %34, %36, %cst_28 {dimension_numbers = #tpu.dot_dimension_numbers<[1], [0], [0], [1], [0, 0, 1, 1], [], []>} : vector<16x3xbf16>, vector<3x32xbf16>, vector<16x32xf32> -> vector<16x32xf32>
    %38 = arith.addf %25, %37 : vector<16x32xf32>
    %39 = vector.extract_strided_slice %33 {offsets = [1, 0], sizes = [16, 3], strides = [1, 1]} : vector<18x3xbf16> to vector<16x3xbf16>
    %c1_29 = arith.constant 1 : index
    %c1_30 = arith.constant 1 : index
    %c0_31 = arith.constant 0 : index
    %c0_32 = arith.constant 0 : index
    %40 = vector.load %arg6[%c1_29, %c1_30, %c0_31, %c0_32] : memref<3x3x3x32xbf16, #tpu.memory_space<vmem>>, vector<1x1x3x32xbf16>
    %41 = vector.shape_cast %40 : vector<1x1x3x32xbf16> to vector<3x32xbf16>
    %cst_33 = arith.constant dense<0.000000e+00> : vector<16x32xf32>
    %42 = tpu.matmul %39, %41, %cst_33 {dimension_numbers = #tpu.dot_dimension_numbers<[1], [0], [0], [1], [0, 0, 1, 1], [], []>} : vector<16x3xbf16>, vector<3x32xbf16>, vector<16x32xf32> -> vector<16x32xf32>
    %43 = arith.addf %38, %42 : vector<16x32xf32>
    %44 = vector.extract_strided_slice %33 {offsets = [2, 0], sizes = [16, 3], strides = [1, 1]} : vector<18x3xbf16> to vector<16x3xbf16>
    %c1_34 = arith.constant 1 : index
    %c2_35 = arith.constant 2 : index
    %c0_36 = arith.constant 0 : index
    %c0_37 = arith.constant 0 : index
    %45 = vector.load %arg6[%c1_34, %c2_35, %c0_36, %c0_37] : memref<3x3x3x32xbf16, #tpu.memory_space<vmem>>, vector<1x1x3x32xbf16>
    %46 = vector.shape_cast %45 : vector<1x1x3x32xbf16> to vector<3x32xbf16>
    %cst_38 = arith.constant dense<0.000000e+00> : vector<16x32xf32>
    %47 = tpu.matmul %44, %46, %cst_38 {dimension_numbers = #tpu.dot_dimension_numbers<[1], [0], [0], [1], [0, 0, 1, 1], [], []>} : vector<16x3xbf16>, vector<3x32xbf16>, vector<16x32xf32> -> vector<16x32xf32>
    %48 = arith.addf %43, %47 : vector<16x32xf32>
    %c0_39 = arith.constant 0 : index
    %c0_40 = arith.constant 0 : index
    %c0_41 = arith.constant 0 : index
    %c0_42 = arith.constant 0 : index
    %49 = vector.load %arg5[%c0_39, %c0_40, %c0_41, %c0_42] : memref<1x1x18x3xbf16, #tpu.memory_space<vmem>>, vector<1x1x18x3xbf16>
    %50 = vector.shape_cast %49 : vector<1x1x18x3xbf16> to vector<18x3xbf16>
    %cst_43 = arith.constant 0.000000e+00 : bf16
    %51 = vector.broadcast %cst_43 : bf16 to vector<18x3xbf16>
    %52 = arith.cmpf oge, %50, %51 : vector<18x3xbf16>
    %53 = arith.truncf %0 : f32 to bf16
    %54 = vector.broadcast %53 : bf16 to vector<18x3xbf16>
    %55 = arith.mulf %54, %50 : vector<18x3xbf16>
    %56 = arith.select %52, %50, %55 : vector<18x3xi1>, vector<18x3xbf16>
    %57 = vector.extract_strided_slice %56 {offsets = [0, 0], sizes = [16, 3], strides = [1, 1]} : vector<18x3xbf16> to vector<16x3xbf16>
    %c2_44 = arith.constant 2 : index
    %c0_45 = arith.constant 0 : index
    %c0_46 = arith.constant 0 : index
    %c0_47 = arith.constant 0 : index
    %58 = vector.load %arg6[%c2_44, %c0_45, %c0_46, %c0_47] : memref<3x3x3x32xbf16, #tpu.memory_space<vmem>>, vector<1x1x3x32xbf16>
    %59 = vector.shape_cast %58 : vector<1x1x3x32xbf16> to vector<3x32xbf16>
    %cst_48 = arith.constant dense<0.000000e+00> : vector<16x32xf32>
    %60 = tpu.matmul %57, %59, %cst_48 {dimension_numbers = #tpu.dot_dimension_numbers<[1], [0], [0], [1], [0, 0, 1, 1], [], []>} : vector<16x3xbf16>, vector<3x32xbf16>, vector<16x32xf32> -> vector<16x32xf32>
    %61 = arith.addf %48, %60 : vector<16x32xf32>
    %62 = vector.extract_strided_slice %56 {offsets = [1, 0], sizes = [16, 3], strides = [1, 1]} : vector<18x3xbf16> to vector<16x3xbf16>
    %c2_49 = arith.constant 2 : index
    %c1_50 = arith.constant 1 : index
    %c0_51 = arith.constant 0 : index
    %c0_52 = arith.constant 0 : index
    %63 = vector.load %arg6[%c2_49, %c1_50, %c0_51, %c0_52] : memref<3x3x3x32xbf16, #tpu.memory_space<vmem>>, vector<1x1x3x32xbf16>
    %64 = vector.shape_cast %63 : vector<1x1x3x32xbf16> to vector<3x32xbf16>
    %cst_53 = arith.constant dense<0.000000e+00> : vector<16x32xf32>
    %65 = tpu.matmul %62, %64, %cst_53 {dimension_numbers = #tpu.dot_dimension_numbers<[1], [0], [0], [1], [0, 0, 1, 1], [], []>} : vector<16x3xbf16>, vector<3x32xbf16>, vector<16x32xf32> -> vector<16x32xf32>
    %66 = arith.addf %61, %65 : vector<16x32xf32>
    %67 = vector.extract_strided_slice %56 {offsets = [2, 0], sizes = [16, 3], strides = [1, 1]} : vector<18x3xbf16> to vector<16x3xbf16>
    %c2_54 = arith.constant 2 : index
    %c2_55 = arith.constant 2 : index
    %c0_56 = arith.constant 0 : index
    %c0_57 = arith.constant 0 : index
    %68 = vector.load %arg6[%c2_54, %c2_55, %c0_56, %c0_57] : memref<3x3x3x32xbf16, #tpu.memory_space<vmem>>, vector<1x1x3x32xbf16>
    %69 = vector.shape_cast %68 : vector<1x1x3x32xbf16> to vector<3x32xbf16>
    %cst_58 = arith.constant dense<0.000000e+00> : vector<16x32xf32>
    %70 = tpu.matmul %67, %69, %cst_58 {dimension_numbers = #tpu.dot_dimension_numbers<[1], [0], [0], [1], [0, 0, 1, 1], [], []>} : vector<16x3xbf16>, vector<3x32xbf16>, vector<16x32xf32> -> vector<16x32xf32>
    %71 = arith.addf %66, %70 : vector<16x32xf32>
    %c0_59 = arith.constant 0 : index
    %c0_60 = arith.constant 0 : index
    %72 = vector.load %arg7[%c0_59, %c0_60] : memref<1x32xf32, #tpu.memory_space<vmem>>, vector<1x32xf32>
    %73 = vector.broadcast %72 : vector<1x32xf32> to vector<16x32xf32>
    %74 = arith.addf %71, %73 : vector<16x32xf32>
    %cst_61 = arith.constant 0.000000e+00 : f32
    %75 = vector.broadcast %cst_61 : f32 to vector<16x32xf32>
    %76 = arith.cmpf oge, %74, %75 : vector<16x32xf32>
    %77 = vector.broadcast %1 : f32 to vector<16x32xf32>
    %78 = arith.mulf %77, %74 : vector<16x32xf32>
    %79 = arith.select %76, %74, %78 : vector<16x32xi1>, vector<16x32xf32>
    %80 = arith.truncf %79 : vector<16x32xf32> to vector<16x32xbf16>
    %c0_62 = arith.constant 0 : index
    %c0_63 = arith.constant 0 : index
    %c0_64 = arith.constant 0 : index
    %c0_65 = arith.constant 0 : index
    %81 = vector.load %arg8[%c0_62, %c0_63, %c0_64, %c0_65] : memref<1x1x16x32xbf16, #tpu.memory_space<vmem>>, vector<1x1x16x32xbf16>
    %82 = vector.shape_cast %81 : vector<1x1x16x32xbf16> to vector<16x32xbf16>
    %83 = vector.shape_cast %80 : vector<16x32xbf16> to vector<1x1x16x32xbf16>
    tpu.vector_store %arg8[%c0_62, %c0_63, %c0_64, %c0_65], %83 {strides = array<i32>} : memref<1x1x16x32xbf16, #tpu.memory_space<vmem>>, vector<1x1x16x32xbf16>,
    return
  }
  func.func @transform_0(%arg0: i32, %arg1: i32) -> i32 {
    %c0_i32 = arith.constant 0 : i32
    %c0_i32_0 = arith.constant 0 : i32
    return %c0_i32 : i32
  }
  func.func @transform_1(%arg0: i32, %arg1: i32) -> (i32, i32, i32, i32) {
    %c0_i32 = arith.constant 0 : i32
    %0 = arith.addi %arg1, %c0_i32 : i32
    %c0_i32_0 = arith.constant 0 : i32
    %c0_i32_1 = arith.constant 0 : i32
    %c0_i32_2 = arith.constant 0 : i32
    return %arg0, %0, %c0_i32_0, %c0_i32_1 : i32, i32, i32, i32
  }
  func.func @transform_2(%arg0: i32, %arg1: i32) -> (i32, i32, i32, i32) {
    %c1_i32 = arith.constant 1 : i32
    %0 = arith.addi %arg1, %c1_i32 : i32
    %c0_i32 = arith.constant 0 : i32
    %c0_i32_0 = arith.constant 0 : i32
    %c0_i32_1 = arith.constant 0 : i32
    return %arg0, %0, %c0_i32, %c0_i32_0 : i32, i32, i32, i32
  }
  func.func @transform_3(%arg0: i32, %arg1: i32) -> (i32, i32, i32, i32) {
    %c2_i32 = arith.constant 2 : i32
    %0 = arith.addi %arg1, %c2_i32 : i32
    %c0_i32 = arith.constant 0 : i32
    %c0_i32_0 = arith.constant 0 : i32
    %c0_i32_1 = arith.constant 0 : i32
    return %arg0, %0, %c0_i32, %c0_i32_0 : i32, i32, i32, i32
  }
  func.func @transform_4(%arg0: i32, %arg1: i32) -> (i32, i32, i32, i32) {
    %c0_i32 = arith.constant 0 : i32
    %c0_i32_0 = arith.constant 0 : i32
    %c0_i32_1 = arith.constant 0 : i32
    %c0_i32_2 = arith.constant 0 : i32
    %c0_i32_3 = arith.constant 0 : i32
    return %c0_i32, %c0_i32_0, %c0_i32_1, %c0_i32_2 : i32, i32, i32, i32
  }
  func.func @transform_5(%arg0: i32, %arg1: i32) -> (i32, i32) {
    %c0_i32 = arith.constant 0 : i32
    %c0_i32_0 = arith.constant 0 : i32
    %c0_i32_1 = arith.constant 0 : i32
    return %c0_i32, %c0_i32_0 : i32, i32
  }
  func.func @transform_6(%arg0: i32, %arg1: i32) -> (i32, i32, i32, i32) {
    %c0_i32 = arith.constant 0 : i32
    %c0_i32_0 = arith.constant 0 : i32
    %c0_i32_1 = arith.constant 0 : i32
    return %arg0, %arg1, %c0_i32, %c0_i32_0 : i32, i32, i32, i32
  }
}

</mosaic_0001>

<llo_original>
// kernel: conv2d_s1.1
$region0: #{conv2d_s1.1}
  #allocation0 [shape = 'u32[]', space=smem, size = 0x4, offset = 0x4, fixed_abs, tag = 'smem constant byte address 0x4 - core index']
  #allocation1 [shape = 'u32[144,128]{1,0:T(1,128)}', space=vmem, size = 0x12000, scoped, tag = 'internal scratch']
  %s0 = inlined_call_operand.vmem [shape: f32[2], index: 0, kind: input, shape index: {}]
  %s1 = inlined_call_operand.vmem [shape: bf16[4,18,18,3], index: 1, kind: input, shape index: {}, may-alias: {1,2,3}]
  %s2 = inlined_call_operand.vmem [shape: bf16[4,18,18,3], index: 2, kind: input, shape index: {}, may-alias: {1,2,3}]
  %s3 = inlined_call_operand.vmem [shape: bf16[4,18,18,3], index: 3, kind: input, shape index: {}, may-alias: {1,2,3}]
  %s4 = inlined_call_operand.vmem [shape: bf16[3,3,3,32], index: 4, kind: input, shape index: {}]
  %s5 = inlined_call_operand.vmem [shape: f32[1,32], index: 5, kind: input, shape index: {}]
  %s6 = inlined_call_operand.hbm [shape: bf16[4,16,16,32], index: 6, kind: output, shape index: {}]
  %s7 = sld [smem:[#allocation0]]
  $region61: #{conv2d_s1.1} parent=0
    _
  %s9 = ssub.s32 1, %s7
  %s10 = scalar_select 0, %s9, %s7
  $region1: #{conv2d_s1.1} parent=0
    #allocation2 [shape = 'u8[512]{0}', space=smem, size = 0x200, scoped, tag = 'input window, operand 0, single buffered']
    #allocation3 [shape = 's32[2]{0}', space=sflag, size = 0x8, scoped, tag = 'scoped memory for conv2d_s1.1']
    #allocation4 [shape = 's32[2]{0}', space=sflag, size = 0x8, scoped, tag = 'scoped memory for conv2d_s1.1']
    #allocation5 [shape = 'u8[8192]{0}', space=vmem, size = 0x2000, scoped, tag = 'output window, operand 0']
    %11 = vsyncpa [#allocation4], 0
    %12 = vsyncpa [#allocation3], 0
    %s13 = scalar_lea.sflag [#allocation3], 1
    %14 = vsyncpa %s13, 0
    loop: start=0, step=1, limit=66
    $region2: #{conv2d_s1.1} parent=1 // loop_pre_header
      _
    $region3: #{conv2d_s1.1} parent=1 // loop_header
      %s16 = sphi 0, %s20
      %p17 = scmp.ge.s32.totalorder %s16, 66
      %s23 = sphi 0, %s35
      %s24 = sphi 0, %s31
      %s25 = sphi 0, %s23
      %s26 = sphi 0, %s24
      %s27 = sphi 0, %s25
      %s28 = sphi 0, %s26
      %s36 = sphi 0, %s36
      %s38 = sphi 0, %s36
      %s39 = sphi 0, %s38
      %s53 = sphi 0, %s39
      %s61 = sphi 0, %s63
      %s64 = sphi 0, %s61
      %s65 = sphi 0, %s64
      %s81 = sphi 0, %s65
      %s91 = sphi 0, %s93
      %s94 = sphi 0, %s91
      %s95 = sphi 0, %s94
      %s111 = sphi 0, %s95
      %s121 = sphi 0, %s123
      %s124 = sphi 0, %s121
      %s125 = sphi 0, %s124
      %s141 = sphi 0, %s125
      %s145 = sphi 0, %s145
      %s147 = sphi 0, %s145
      %s148 = sphi 0, %s147
      %s162 = sphi 0, %s148
      %s166 = sphi 0, %s166
      %s168 = sphi 0, %s166
      %s169 = sphi 0, %s168
      %s183 = sphi 0, %s169
      %s191 = sphi 0, %s193
      %s194 = sphi 0, %s191
      %s195 = sphi 0, %s194
      %s211 = sphi 0, %s195
    $region4: #{conv2d_s1.1} parent=1 // loop_header_branch
      %19 = sbr.rel (%p17) target = $region8
    $region5: #{conv2d_s1.1} parent=1 // loop_body
      %s21 = ssub.s32 %s16, 1
      %s22 = ssub.s32 %s16, 2
      %s29 = sadd.s32 1, %s24
      %p30 = scmp.ge.s32.totalorder %s29, 16
      %s31 = scalar_select %p30, 0, %s29
      %s32 = sadd.s32 1, %s23
      %s33 = scalar_select %p30, %s32, %s23
      %p34 = scmp.ge.s32.totalorder %s33, 4
      %s35 = scalar_select %p34, 0, %s33
      %s37 = sadd.s32 %s36, 1
      %p40 = scmp.eq.s32.totalorder %s16, 63
      %p41 = scmp.ne.s32.totalorder %s36, %s38
      %p42 = scmp.eq.s32.totalorder %s16, 0
      %p43 = por %p41, %p42
      %p44 = scmp.ne.s32.totalorder %s36, %s38
      %p45 = scmp.eq.s32.totalorder %s21, 63
      %p46 = por %p44, %p45
      %p47 = scmp.ne.s32.totalorder %s38, %s39
      %p48 = scmp.eq.s32.totalorder %s21, 0
      %p49 = por %p47, %p48
      %p50 = scmp.ne.s32.totalorder %s38, %s39
      %p51 = scmp.eq.s32.totalorder %s22, 63
      %p52 = por %p50, %p51
      %p54 = scmp.ne.s32.totalorder %s39, %s53
      %p55 = scmp.eq.s32.totalorder %s22, 0
      %p56 = por %p54, %p55
      %s57 = ssub.s32 %s23, %s35
      %s58 = ssub.s32 %s24, %s31
      %s59 = sor.u32 %s57, %s58
      %p60 = scmp.eq.s32.totalorder %s59, 0
      %s62 = sadd.s32 %s61, 1
      %s63 = scalar_select %p60, %s61, %s62
      %p66 = pneg %p60
      %p67 = scmp.eq.s32.totalorder %s16, 63
      %p68 = por %p66, %p67
      %p69 = scmp.ne.s32.totalorder %s61, %s64
      %p70 = scmp.eq.s32.totalorder %s16, 0
      %p71 = por %p69, %p70
      %p72 = scmp.ne.s32.totalorder %s61, %s64
      %p73 = scmp.eq.s32.totalorder %s21, 63
      %p74 = por %p72, %p73
      %p75 = scmp.ne.s32.totalorder %s64, %s65
      %p76 = scmp.eq.s32.totalorder %s21, 0
      %p77 = por %p75, %p76
      %p78 = scmp.ne.s32.totalorder %s64, %s65
      %p79 = scmp.eq.s32.totalorder %s22, 63
      %p80 = por %p78, %p79
      %p82 = scmp.ne.s32.totalorder %s65, %s81
      %p83 = scmp.eq.s32.totalorder %s22, 0
      %p84 = por %p82, %p83
      %s85 = sadd.s32 %s24, 1
      %s86 = sadd.s32 %s31, 1
      %s87 = ssub.s32 %s23, %s35
      %s88 = ssub.s32 %s85, %s86
      %s89 = sor.u32 %s87, %s88
      %p90 = scmp.eq.s32.totalorder %s89, 0
      %s92 = sadd.s32 %s91, 1
      %s93 = scalar_select %p90, %s91, %s92
      %p96 = pneg %p90
      %p97 = scmp.eq.s32.totalorder %s16, 63
      %p98 = por %p96, %p97
      %p99 = scmp.ne.s32.totalorder %s91, %s94
      %p100 = scmp.eq.s32.totalorder %s16, 0
      %p101 = por %p99, %p100
      %p102 = scmp.ne.s32.totalorder %s91, %s94
      %p103 = scmp.eq.s32.totalorder %s21, 63
      %p104 = por %p102, %p103
      %p105 = scmp.ne.s32.totalorder %s94, %s95
      %p106 = scmp.eq.s32.totalorder %s21, 0
      %p107 = por %p105, %p106
      %p108 = scmp.ne.s32.totalorder %s94, %s95
      %p109 = scmp.eq.s32.totalorder %s22, 63
      %p110 = por %p108, %p109
      %p112 = scmp.ne.s32.totalorder %s95, %s111
      %p113 = scmp.eq.s32.totalorder %s22, 0
      %p114 = por %p112, %p113
      %s115 = sadd.s32 %s24, 2
      %s116 = sadd.s32 %s31, 2
      %s117 = ssub.s32 %s23, %s35
      %s118 = ssub.s32 %s115, %s116
      %s119 = sor.u32 %s117, %s118
      %p120 = scmp.eq.s32.totalorder %s119, 0
      %s122 = sadd.s32 %s121, 1
      %s123 = scalar_select %p120, %s121, %s122
      %p126 = pneg %p120
      %p127 = scmp.eq.s32.totalorder %s16, 63
      %p128 = por %p126, %p127
      %p129 = scmp.ne.s32.totalorder %s121, %s124
      %p130 = scmp.eq.s32.totalorder %s16, 0
      %p131 = por %p129, %p130
      %p132 = scmp.ne.s32.totalorder %s121, %s124
      %p133 = scmp.eq.s32.totalorder %s21, 63
      %p134 = por %p132, %p133
      %p135 = scmp.ne.s32.totalorder %s124, %s125
      %p136 = scmp.eq.s32.totalorder %s21, 0
      %p137 = por %p135, %p136
      %p138 = scmp.ne.s32.totalorder %s124, %s125
      %p139 = scmp.eq.s32.totalorder %s22, 63
      %p140 = por %p138, %p139
      %p142 = scmp.ne.s32.totalorder %s125, %s141
      %p143 = scmp.eq.s32.totalorder %s22, 0
      %p144 = por %p142, %p143
      %s146 = sadd.s32 %s145, 1
      %p149 = scmp.eq.s32.totalorder %s16, 63
      %p150 = scmp.ne.s32.totalorder %s145, %s147
      %p151 = scmp.eq.s32.totalorder %s16, 0
      %p152 = por %p150, %p151
      %p153 = scmp.ne.s32.totalorder %s145, %s147
      %p154 = scmp.eq.s32.totalorder %s21, 63
      %p155 = por %p153, %p154
      %p156 = scmp.ne.s32.totalorder %s147, %s148
      %p157 = scmp.eq.s32.totalorder %s21, 0
      %p158 = por %p156, %p157
      %p159 = scmp.ne.s32.totalorder %s147, %s148
      %p160 = scmp.eq.s32.totalorder %s22, 63
      %p161 = por %p159, %p160
      %p163 = scmp.ne.s32.totalorder %s148, %s162
      %p164 = scmp.eq.s32.totalorder %s22, 0
      %p165 = por %p163, %p164
      %s167 = sadd.s32 %s166, 1
      %p170 = scmp.eq.s32.totalorder %s16, 63
      %p171 = scmp.ne.s32.totalorder %s166, %s168
      %p172 = scmp.eq.s32.totalorder %s16, 0
      %p173 = por %p171, %p172
      %p174 = scmp.ne.s32.totalorder %s166, %s168
      %p175 = scmp.eq.s32.totalorder %s21, 63
      %p176 = por %p174, %p175
      %p177 = scmp.ne.s32.totalorder %s168, %s169
      %p178 = scmp.eq.s32.totalorder %s21, 0
      %p179 = por %p177, %p178
      %p180 = scmp.ne.s32.totalorder %s168, %s169
      %p181 = scmp.eq.s32.totalorder %s22, 63
      %p182 = por %p180, %p181
      %p184 = scmp.ne.s32.totalorder %s169, %s183
      %p185 = scmp.eq.s32.totalorder %s22, 0
      %p186 = por %p184, %p185
      %s187 = ssub.s32 %s23, %s35
      %s188 = ssub.s32 %s24, %s31
      %s189 = sor.u32 %s187, %s188
      %p190 = scmp.eq.s32.totalorder %s189, 0
      %s192 = sadd.s32 %s191, 1
      %s193 = scalar_select %p190, %s191, %s192
      %p196 = pneg %p190
      %p197 = scmp.eq.s32.totalorder %s16, 63
      %p198 = por %p196, %p197
      %p199 = scmp.ne.s32.totalorder %s191, %s194
      %p200 = scmp.eq.s32.totalorder %s16, 0
      %p201 = por %p199, %p200
      %p202 = scmp.ne.s32.totalorder %s191, %s194
      %p203 = scmp.eq.s32.totalorder %s21, 63
      %p204 = por %p202, %p203
      %p205 = scmp.ne.s32.totalorder %s194, %s195
      %p206 = scmp.eq.s32.totalorder %s21, 0
      %p207 = por %p205, %p206
      %p208 = scmp.ne.s32.totalorder %s194, %s195
      %p209 = scmp.eq.s32.totalorder %s22, 63
      %p210 = por %p208, %p209
      %p212 = scmp.ne.s32.totalorder %s195, %s211
      %p213 = scmp.eq.s32.totalorder %s22, 0
      %p214 = por %p212, %p213
      %p215 = scmp.le.s32.totalorder 1, %s16
      %p216 = scmp.lt.s32.totalorder %s16, 65
      %p217 = pnand %p215, %p216
      %p218 = pneg %p217
      // Predicated region
      $region9: #{conv2d_s1.1} parent=5 // pred_check
        _
      $region10: #{conv2d_s1.1} parent=5 // pred_check_branch
        %220 = sbr.rel (%p217) target = $region12
      $region11: #{conv2d_s1.1} parent=5 // pred_region
        %s221 = ssub.s32 %s16, 1
        // Predicated region
        $region13: #{conv2d_s1.1} parent=11 // pred_check
          %p222 = pneg %p49
        $region14: #{conv2d_s1.1} parent=11 // pred_check_branch
          %224 = sbr.rel (%p222) target = $region16
        $region15: #{conv2d_s1.1} parent=11 // pred_region
          %s226 = ssub.s32 16, 16
          %227 = vsyncadd [#allocation4], %s226
          %s229 = sshll.u32 %s0, 4
          %s230 = int_to_ptr.vmem [resolvable:$true] %s229
          %232 = dma.vmem_to_smem %s230, 16, [#allocation2], [#allocation4]
        $region16: #{conv2d_s1.1} parent=11 // pred_fallthru
          _
        // Predicated region
        $region17: #{conv2d_s1.1} parent=11 // pred_check
          %p233 = pneg %p158
        $region18: #{conv2d_s1.1} parent=11 // pred_check_branch
          %235 = sbr.rel (%p233) target = $region20
        $region19: #{conv2d_s1.1} parent=11 // pred_region
          _
        $region20: #{conv2d_s1.1} parent=11 // pred_fallthru
          _
        // Predicated region
        $region21: #{conv2d_s1.1} parent=11 // pred_check
          %p236 = pneg %p179
        $region22: #{conv2d_s1.1} parent=11 // pred_check_branch
          %238 = sbr.rel (%p236) target = $region24
        $region23: #{conv2d_s1.1} parent=11 // pred_region
          _
        $region24: #{conv2d_s1.1} parent=11 // pred_fallthru
          _
      $region12: #{conv2d_s1.1} parent=5 // pred_fallthru
        _
      %p239 = scmp.lt.s32.totalorder %s16, 64
      // Predicated region
      $region25: #{conv2d_s1.1} parent=5 // pred_check
        %p240 = pneg %p239
      $region26: #{conv2d_s1.1} parent=5 // pred_check_branch
        %242 = sbr.rel (%p240) target = $region28
      $region27: #{conv2d_s1.1} parent=5 // pred_region
        // Predicated region
        $region29: #{conv2d_s1.1} parent=27 // pred_check
          %p243 = pneg %p71
        $region30: #{conv2d_s1.1} parent=27 // pred_check_branch
          %245 = sbr.rel (%p243) target = $region32
        $region31: #{conv2d_s1.1} parent=27 // pred_region
          %p246 = scmp.lt.s32.totalorder %s23, 3
          %s247 = scalar_select %p246, %s23, 3
          %p248 = scmp.lt.s32.totalorder %s24, 17
          %s249 = scalar_select %p248, %s24, 17
          %s250 = smul.addr %s249, 3
          %s251 = smul.addr %s247, 54
          %s252 = sadd.s32 %s250, %s251
          %s253 = smul.addr %s252, 4
          %s254 = scalar_lea.vmem %s1, %s253
        $region32: #{conv2d_s1.1} parent=27 // pred_fallthru
          _
        // Predicated region
        $region33: #{conv2d_s1.1} parent=27 // pred_check
          %p255 = pneg %p101
        $region34: #{conv2d_s1.1} parent=27 // pred_check_branch
          %257 = sbr.rel (%p255) target = $region36
        $region35: #{conv2d_s1.1} parent=27 // pred_region
          %s258 = sadd.s32 %s24, 1
          %p259 = scmp.lt.s32.totalorder %s23, 3
          %s260 = scalar_select %p259, %s23, 3
          %p261 = scmp.lt.s32.totalorder %s258, 17
          %s262 = scalar_select %p261, %s258, 17
          %s263 = smul.addr %s262, 3
          %s264 = smul.addr %s260, 54
          %s265 = sadd.s32 %s263, %s264
          %s266 = smul.addr %s265, 4
          %s267 = scalar_lea.vmem %s2, %s266
          %s268 = sadd.s32 %s24, 1
        $region36: #{conv2d_s1.1} parent=27 // pred_fallthru
          _
        // Predicated region
        $region37: #{conv2d_s1.1} parent=27 // pred_check
          %p269 = pneg %p131
        $region38: #{conv2d_s1.1} parent=27 // pred_check_branch
          %271 = sbr.rel (%p269) target = $region40
        $region39: #{conv2d_s1.1} parent=27 // pred_region
          %s272 = sadd.s32 %s24, 2
          %p273 = scmp.lt.s32.totalorder %s23, 3
          %s274 = scalar_select %p273, %s23, 3
          %p275 = scmp.lt.s32.totalorder %s272, 17
          %s276 = scalar_select %p275, %s272, 17
          %s277 = smul.addr %s276, 3
          %s278 = smul.addr %s274, 54
          %s279 = sadd.s32 %s277, %s278
          %s280 = smul.addr %s279, 4
          %s281 = scalar_lea.vmem %s3, %s280
          %s282 = sadd.s32 %s24, 2
        $region40: #{conv2d_s1.1} parent=27 // pred_fallthru
          _
      $region28: #{conv2d_s1.1} parent=5 // pred_fallthru
        _
      %p283 = scmp.le.s32.totalorder 1, %s16
      %p284 = scmp.lt.s32.totalorder %s16, 65
      %p285 = pnand %p283, %p284
      %p286 = pneg %p285
      // Predicated region
      $region41: #{conv2d_s1.1} parent=5 // pred_check
        _
      $region42: #{conv2d_s1.1} parent=5 // pred_check_branch
        %288 = sbr.rel (%p285) target = $region44
      $region43: #{conv2d_s1.1} parent=5 // pred_region
        %s289 = ssub.s32 %s16, 1
        // Predicated region
        $region45: #{conv2d_s1.1} parent=43 // pred_check
          %p290 = pneg %p49
        $region46: #{conv2d_s1.1} parent=43 // pred_check_branch
          %292 = sbr.rel (%p290) target = $region48
        $region47: #{conv2d_s1.1} parent=43 // pred_region
          %293 = dma.done [#allocation4], 16
        $region48: #{conv2d_s1.1} parent=43 // pred_fallthru
          _
        %294 = sfence
        %p295 = pneg %p49
        %p296 = pneg %p46
        %p297 = scmp.lt.s32.totalorder %s25, 3
        %s298 = scalar_select %p297, %s25, 3
        %p299 = scmp.lt.s32.totalorder %s26, 17
        %s300 = scalar_select %p299, %s26, 17
        %s301 = smul.addr %s300, 3
        %s302 = smul.addr %s298, 54
        %s303 = sadd.s32 %s301, %s302
        %s304 = smul.addr %s303, 4
        %s305 = scalar_lea.vmem %s1, %s304
        %p306 = pneg %p77
        %p307 = pneg %p74
        %s308 = sadd.s32 %s26, 1
        %p309 = scmp.lt.s32.totalorder %s25, 3
        %s310 = scalar_select %p309, %s25, 3
        %p311 = scmp.lt.s32.totalorder %s308, 17
        %s312 = scalar_select %p311, %s308, 17
        %s313 = smul.addr %s312, 3
        %s314 = smul.addr %s310, 54
        %s315 = sadd.s32 %s313, %s314
        %s316 = smul.addr %s315, 4
        %s317 = scalar_lea.vmem %s2, %s316
        %p318 = pneg %p107
        %p319 = pneg %p104
        %s320 = sadd.s32 %s26, 2
        %p321 = scmp.lt.s32.totalorder %s25, 3
        %s322 = scalar_select %p321, %s25, 3
        %p323 = scmp.lt.s32.totalorder %s320, 17
        %s324 = scalar_select %p323, %s320, 17
        %s325 = smul.addr %s324, 3
        %s326 = smul.addr %s322, 54
        %s327 = sadd.s32 %s325, %s326
        %s328 = smul.addr %s327, 4
        %s329 = scalar_lea.vmem %s3, %s328
        %p330 = pneg %p137
        %p331 = pneg %p134
        %p332 = pneg %p158
        %p333 = pneg %p155
        %p334 = pneg %p179
        %p335 = pneg %p176
        %p336 = pneg %p207
        %p337 = pneg %p204
        %s338 = sand.u32 %s194, 1
        %s339 = scalar_lea.sflag [#allocation3], %s338
        %s340 = sand.u32 %s194, 1
        %s341 = smul.addr %s340, 8
        %s342 = scalar_lea.vmem [#allocation5], %s341
        %p343 = scmp.lt.s32.totalorder %s25, 3
        %s344 = scalar_select %p343, %s25, 3
        %p345 = scmp.lt.s32.totalorder %s26, 17
        %s346 = scalar_select %p345, %s26, 17
        %s347 = smul.addr %s346, 3
        %s348 = smul.addr %s344, 54
        %s349 = sadd.s32 %s347, %s348
        %s350 = smul.addr %s349, 4
        %s351 = scalar_lea.vmem %s1, %s350
        %s352 = sadd.s32 %s26, 1
        %p353 = scmp.lt.s32.totalorder %s25, 3
        %s354 = scalar_select %p353, %s25, 3
        %p355 = scmp.lt.s32.totalorder %s352, 17
        %s356 = scalar_select %p355, %s352, 17
        %s357 = smul.addr %s356, 3
        %s358 = smul.addr %s354, 54
        %s359 = sadd.s32 %s357, %s358
        %s360 = smul.addr %s359, 4
        %s361 = scalar_lea.vmem %s2, %s360
        %s362 = sadd.s32 %s26, 1
        %s363 = sadd.s32 %s26, 2
        %p364 = scmp.lt.s32.totalorder %s25, 3
        %s365 = scalar_select %p364, %s25, 3
        %p366 = scmp.lt.s32.totalorder %s363, 17
        %s367 = scalar_select %p366, %s363, 17
        %s368 = smul.addr %s367, 3
        %s369 = smul.addr %s365, 54
        %s370 = sadd.s32 %s368, %s369
        %s371 = smul.addr %s370, 4
        %s372 = scalar_lea.vmem %s3, %s371
        %s373 = sadd.s32 %s26, 2
        %s375 = sld [smem:[#allocation2]]
        %s376 = sld [smem:[#allocation2 + $0x1]]
        %v377 = vld [vmem:[%s351] sm:$0xf]
        %v378 = vld [vmem:[%s351 + $0x4] sm:$0xf]
        %v379 = vld [vmem:[%s351 + $0x8] sm:$0x1]
        %vm380 = vcmp.ge.bf16.partialorder %v377, 0
        %vm381 = vcmp.ge.bf16.partialorder %v378, 0
        %vm382 = vcmp.ge.bf16.partialorder %v379, 0
        %p384 = scmp.ne.f32.partialorder %s375, %s375
        %s385 = sshrl.u32 %s375, 16
        %s386 = sand.u32 %s385, 1
        %s387 = sadd.s32 32767, %s386
        %s388 = sadd.s32 %s375, %s387
        %s389 = sand.u32 %s388, 4294901760
        %s390 = scalar_select %p384, 2143289344, %s389
        %s392 = sshrl.u32 %s390, 16
        %s393 = sshll.u32 %s392, 16
        %s394 = sor.u32 %s392, %s393
        %v395 = vstv %s394
        %v397 = vmul.bf16 %v395, %v377
        %v398 = vmul.bf16 %v395, %v378
        %v399 = vmul.bf16 %v395, %v379
        %v400 = vsel %vm380, %v377, %v397
        %v401 = vsel %vm381, %v378, %v398
        %v402 = vsel %vm382, %v379, %v399
        %v403 = vld [vmem:[%s4] sm:$0x3]
        %s404 = scalar_lea.vmem %s4, 2
        %v405 = vld [vmem:[%s404] sm:$0x3]
        %v409 = vunpack.c.l.b16 %v400
        %v410 = vunpack.c.l.b16 %v401
        %v411 = vunpack.c.l.b16 %v402
        %v412 = vpack.c.b16 %v410, %v409
        %v413 = vpack.c.b16 %v411, %v411
        %vm414 = vsmask.f32 7424
        %v416 = vshrl.u32 %v412, 16
        %v418 = vshll.u32 %v412, 16
        %v420 = vrot.slane %v418, 1
        %v421 = vor.u32 %v416, %v420
        %v423 = vshll.u32 %v413, 16
        %v425 = vrot.slane %v423, 1
        %v426 = vsel %vm414, %v421, %v425
        %vm427 = vcmask 23552
        %v429 = vsel %vm427, %v426, 0
        %vm431 = vcmask 1040384
        %vm432 = vcmask 1041408
        %v433 = vsel %vm431, 4294967295, 65535
        %v434 = vsel %vm432, %v433, 0
        %v436 = vand.u32 %v405, %v434
        %438 = vmatprep.subr.bf16.mxu0 0
        %439 = vmatpush1.bf16.msra.mxu0 0
        %440 = vmatprep.subr.bf16.mxu0 0
        %441 = vmatpush1.bf16.msra.mxu0 0
        %442 = vmatprep.subr.bf16.mxu0 0
        %443 = vmatpush1.bf16.msra.mxu0 0
        %444 = vmatprep.subr.bf16.mxu0 0
        %445 = vmatpush1.bf16.msra.mxu0 0
        %446 = vmatprep.subr.bf16.mxu0 0
        %447 = vmatpush1.bf16.msra.mxu0 0
        %448 = vmatprep.subr.bf16.mxu0 0
        %449 = vmatpush1.bf16.msra.mxu0 0
        %450 = vmatprep.subr.bf16.mxu0 0
        %451 = vmatpush1.bf16.msra.mxu0 0
        %452 = vmatprep.subr.bf16.mxu0 0
        %453 = vmatpush1.bf16.msra.mxu0 %v436
        %454 = vmatprep.subr.bf16.mxu0 0
        %455 = vmatpush2.bf16.msra.mxu0 0
        %456 = vmatprep.subr.bf16.mxu0 0
        %457 = vmatpush2.bf16.msra.mxu0 0
        %458 = vmatprep.subr.bf16.mxu0 0
        %459 = vmatpush2.bf16.msra.mxu0 0
        %460 = vmatprep.subr.bf16.mxu0 0
        %461 = vmatpush2.bf16.msra.mxu0 0
        %462 = vmatprep.subr.bf16.mxu0 0
        %463 = vmatpush2.bf16.msra.mxu0 0
        %464 = vmatprep.subr.bf16.mxu0 0
        %465 = vmatpush2.bf16.msra.mxu0 0
        %466 = vmatprep.subr.bf16.mxu0 0
        %467 = vmatpush2.bf16.msra.mxu0 0
        %468 = vmatprep.subr.bf16.mxu0 0
        %469 = vmatpush2.bf16.msra.mxu0 0
        %470 = vmatprep.mubr.bf16.mxu0 0
        %471 = vmatmul.mubr.bf16.gmra.mxu0 %v429
        %v472 = vpop.f32.mrf.mxu0
        %v473 = vadd.f32 0.0, %v472
        %v474 = vpop.f32.mrf.mxu0
        %v475 = vpop.f32.mrf.mxu0
        %v476 = vadd.f32 0.0, %v475
        %v477 = vpop.f32.mrf.mxu0
        %478 = vdwg.mxu0
        %v479 = vsel %vm427, %v412, 0
        %v482 = vand.u32 %v403, %v434
        %484 = vmatprep.subr.bf16.mxu0 0
        %485 = vmatpush1.bf16.msra.mxu0 0
        %486 = vmatprep.subr.bf16.mxu0 0
        %487 = vmatpush1.bf16.msra.mxu0 0
        %488 = vmatprep.subr.bf16.mxu0 0
        %489 = vmatpush1.bf16.msra.mxu0 0
        %490 = vmatprep.subr.bf16.mxu0 0
        %491 = vmatpush1.bf16.msra.mxu0 0
        %492 = vmatprep.subr.bf16.mxu0 0
        %493 = vmatpush1.bf16.msra.mxu0 0
        %494 = vmatprep.subr.bf16.mxu0 0
        %495 = vmatpush1.bf16.msra.mxu0 0
        %496 = vmatprep.subr.bf16.mxu0 0
        %497 = vmatpush1.bf16.msra.mxu0 0
        %498 = vmatprep.subr.bf16.mxu0 0
        %499 = vmatpush1.bf16.msra.mxu0 %v482
        %500 = vmatprep.subr.bf16.mxu0 0
        %501 = vmatpush2.bf16.msra.mxu0 0
        %502 = vmatprep.subr.bf16.mxu0 0
        %503 = vmatpush2.bf16.msra.mxu0 0
        %504 = vmatprep.subr.bf16.mxu0 0
        %505 = vmatpush2.bf16.msra.mxu0 0
        %506 = vmatprep.subr.bf16.mxu0 0
        %507 = vmatpush2.bf16.msra.mxu0 0
        %508 = vmatprep.subr.bf16.mxu0 0
        %509 = vmatpush2.bf16.msra.mxu0 0
        %510 = vmatprep.subr.bf16.mxu0 0
        %511 = vmatpush2.bf16.msra.mxu0 0
        %512 = vmatprep.subr.bf16.mxu0 0
        %513 = vmatpush2.bf16.msra.mxu0 0
        %514 = vmatprep.subr.bf16.mxu0 0
        %515 = vmatpush2.bf16.msra.mxu0 0
        %516 = vmatprep.mubr.bf16.mxu0 0
        %517 = vmatmul.mubr.bf16.gmra.mxu0 %v479
        %v518 = vpop.f32.mrf.mxu0
        %v519 = vadd.f32 %v473, %v518
        %v520 = vpop.f32.mrf.mxu0
        %v521 = vpop.f32.mrf.mxu0
        %v522 = vadd.f32 %v476, %v521
        %v523 = vpop.f32.mrf.mxu0
        %524 = vdwg.mxu0
        %s525 = scalar_lea.vmem %s4, 4
        %v526 = vld [vmem:[%s525] sm:$0x3]
        %vm527 = vcmask 1046528
        %v528 = vrot.slane %v412, 1
        %v529 = vrot.slane %v413, 1
        %v530 = vsel %vm527, %v528, %v529
        %v532 = vsel %vm427, %v530, 0
        %v535 = vand.u32 %v526, %v434
        %537 = vmatprep.subr.bf16.mxu0 0
        %538 = vmatpush1.bf16.msra.mxu0 0
        %539 = vmatprep.subr.bf16.mxu0 0
        %540 = vmatpush1.bf16.msra.mxu0 0
        %541 = vmatprep.subr.bf16.mxu0 0
        %542 = vmatpush1.bf16.msra.mxu0 0
        %543 = vmatprep.subr.bf16.mxu0 0
        %544 = vmatpush1.bf16.msra.mxu0 0
        %545 = vmatprep.subr.bf16.mxu0 0
        %546 = vmatpush1.bf16.msra.mxu0 0
        %547 = vmatprep.subr.bf16.mxu0 0
        %548 = vmatpush1.bf16.msra.mxu0 0
        %549 = vmatprep.subr.bf16.mxu0 0
        %550 = vmatpush1.bf16.msra.mxu0 0
        %551 = vmatprep.subr.bf16.mxu0 0
        %552 = vmatpush1.bf16.msra.mxu0 %v535
        %553 = vmatprep.subr.bf16.mxu0 0
        %554 = vmatpush2.bf16.msra.mxu0 0
        %555 = vmatprep.subr.bf16.mxu0 0
        %556 = vmatpush2.bf16.msra.mxu0 0
        %557 = vmatprep.subr.bf16.mxu0 0
        %558 = vmatpush2.bf16.msra.mxu0 0
        %559 = vmatprep.subr.bf16.mxu0 0
        %560 = vmatpush2.bf16.msra.mxu0 0
        %561 = vmatprep.subr.bf16.mxu0 0
        %562 = vmatpush2.bf16.msra.mxu0 0
        %563 = vmatprep.subr.bf16.mxu0 0
        %564 = vmatpush2.bf16.msra.mxu0 0
        %565 = vmatprep.subr.bf16.mxu0 0
        %566 = vmatpush2.bf16.msra.mxu0 0
        %567 = vmatprep.subr.bf16.mxu0 0
        %568 = vmatpush2.bf16.msra.mxu0 0
        %569 = vmatprep.mubr.bf16.mxu0 0
        %570 = vmatmul.mubr.bf16.gmra.mxu0 %v532
        %v571 = vpop.f32.mrf.mxu0
        %v572 = vadd.f32 0.0, %v571
        %v573 = vpop.f32.mrf.mxu0
        %v574 = vpop.f32.mrf.mxu0
        %v575 = vadd.f32 0.0, %v574
        %v576 = vpop.f32.mrf.mxu0
        %577 = vdwg.mxu0
        %v578 = vadd.f32 %v519, %v572
        %v579 = vadd.f32 %v522, %v575
        %v580 = vld [vmem:[%s361] sm:$0xf]
        %v581 = vld [vmem:[%s361 + $0x4] sm:$0xf]
        %v582 = vld [vmem:[%s361 + $0x8] sm:$0x1]
        %vm583 = vcmp.ge.bf16.partialorder %v580, 0
        %vm584 = vcmp.ge.bf16.partialorder %v581, 0
        %vm585 = vcmp.ge.bf16.partialorder %v582, 0
        %v586 = vmul.bf16 %v395, %v580
        %v587 = vmul.bf16 %v395, %v581
        %v588 = vmul.bf16 %v395, %v582
        %v589 = vsel %vm583, %v580, %v586
        %v590 = vsel %vm584, %v581, %v587
        %v591 = vsel %vm585, %v582, %v588
        %s592 = scalar_lea.vmem %s4, 6
        %v593 = vld [vmem:[%s592] sm:$0x3]
        %v596 = vunpack.c.l.b16 %v589
        %v597 = vunpack.c.l.b16 %v590
        %v598 = vpack.c.b16 %v597, %v596
        %v600 = vsel %vm427, %v598, 0
        %v603 = vand.u32 %v593, %v434
        %605 = vmatprep.subr.bf16.mxu0 0
        %606 = vmatpush1.bf16.msra.mxu0 0
        %607 = vmatprep.subr.bf16.mxu0 0
        %608 = vmatpush1.bf16.msra.mxu0 0
        %609 = vmatprep.subr.bf16.mxu0 0
        %610 = vmatpush1.bf16.msra.mxu0 0
        %611 = vmatprep.subr.bf16.mxu0 0
        %612 = vmatpush1.bf16.msra.mxu0 0
        %613 = vmatprep.subr.bf16.mxu0 0
        %614 = vmatpush1.bf16.msra.mxu0 0
        %615 = vmatprep.subr.bf16.mxu0 0
        %616 = vmatpush1.bf16.msra.mxu0 0
        %617 = vmatprep.subr.bf16.mxu0 0
        %618 = vmatpush1.bf16.msra.mxu0 0
        %619 = vmatprep.subr.bf16.mxu0 0
        %620 = vmatpush1.bf16.msra.mxu0 %v603
        %621 = vmatprep.subr.bf16.mxu0 0
        %622 = vmatpush2.bf16.msra.mxu0 0
        %623 = vmatprep.subr.bf16.mxu0 0
        %624 = vmatpush2.bf16.msra.mxu0 0
        %625 = vmatprep.subr.bf16.mxu0 0
        %626 = vmatpush2.bf16.msra.mxu0 0
        %627 = vmatprep.subr.bf16.mxu0 0
        %628 = vmatpush2.bf16.msra.mxu0 0
        %629 = vmatprep.subr.bf16.mxu0 0
        %630 = vmatpush2.bf16.msra.mxu0 0
        %631 = vmatprep.subr.bf16.mxu0 0
        %632 = vmatpush2.bf16.msra.mxu0 0
        %633 = vmatprep.subr.bf16.mxu0 0
        %634 = vmatpush2.bf16.msra.mxu0 0
        %635 = vmatprep.subr.bf16.mxu0 0
        %636 = vmatpush2.bf16.msra.mxu0 0
        %637 = vmatprep.mubr.bf16.mxu0 0
        %638 = vmatmul.mubr.bf16.gmra.mxu0 %v600
        %v639 = vpop.f32.mrf.mxu0
        %v640 = vadd.f32 0.0, %v639
        %v641 = vpop.f32.mrf.mxu0
        %v642 = vpop.f32.mrf.mxu0
        %v643 = vadd.f32 0.0, %v642
        %v644 = vpop.f32.mrf.mxu0
        %645 = vdwg.mxu0
        %v646 = vadd.f32 %v578, %v640
        %v647 = vadd.f32 %v579, %v643
        %s648 = scalar_lea.vmem %s4, 8
        %v649 = vld [vmem:[%s648] sm:$0x3]
        %v651 = vunpack.c.l.b16 %v591
        %v652 = vpack.c.b16 %v651, %v651
        %v653 = vshrl.u32 %v598, 16
        %v655 = vshll.u32 %v598, 16
        %v657 = vrot.slane %v655, 1
        %v658 = vor.u32 %v653, %v657
        %v660 = vshll.u32 %v652, 16
        %v662 = vrot.slane %v660, 1
        %v663 = vsel %vm414, %v658, %v662
        %v665 = vsel %vm427, %v663, 0
        %v668 = vand.u32 %v649, %v434
        %670 = vmatprep.subr.bf16.mxu0 0
        %671 = vmatpush1.bf16.msra.mxu0 0
        %672 = vmatprep.subr.bf16.mxu0 0
        %673 = vmatpush1.bf16.msra.mxu0 0
        %674 = vmatprep.subr.bf16.mxu0 0
        %675 = vmatpush1.bf16.msra.mxu0 0
        %676 = vmatprep.subr.bf16.mxu0 0
        %677 = vmatpush1.bf16.msra.mxu0 0
        %678 = vmatprep.subr.bf16.mxu0 0
        %679 = vmatpush1.bf16.msra.mxu0 0
        %680 = vmatprep.subr.bf16.mxu0 0
        %681 = vmatpush1.bf16.msra.mxu0 0
        %682 = vmatprep.subr.bf16.mxu0 0
        %683 = vmatpush1.bf16.msra.mxu0 0
        %684 = vmatprep.subr.bf16.mxu0 0
        %685 = vmatpush1.bf16.msra.mxu0 %v668
        %686 = vmatprep.subr.bf16.mxu0 0
        %687 = vmatpush2.bf16.msra.mxu0 0
        %688 = vmatprep.subr.bf16.mxu0 0
        %689 = vmatpush2.bf16.msra.mxu0 0
        %690 = vmatprep.subr.bf16.mxu0 0
        %691 = vmatpush2.bf16.msra.mxu0 0
        %692 = vmatprep.subr.bf16.mxu0 0
        %693 = vmatpush2.bf16.msra.mxu0 0
        %694 = vmatprep.subr.bf16.mxu0 0
        %695 = vmatpush2.bf16.msra.mxu0 0
        %696 = vmatprep.subr.bf16.mxu0 0
        %697 = vmatpush2.bf16.msra.mxu0 0
        %698 = vmatprep.subr.bf16.mxu0 0
        %699 = vmatpush2.bf16.msra.mxu0 0
        %700 = vmatprep.subr.bf16.mxu0 0
        %701 = vmatpush2.bf16.msra.mxu0 0
        %702 = vmatprep.mubr.bf16.mxu0 0
        %703 = vmatmul.mubr.bf16.gmra.mxu0 %v665
        %v704 = vpop.f32.mrf.mxu0
        %v705 = vadd.f32 0.0, %v704
        %v706 = vpop.f32.mrf.mxu0
        %v707 = vpop.f32.mrf.mxu0
        %v708 = vadd.f32 0.0, %v707
        %v709 = vpop.f32.mrf.mxu0
        %710 = vdwg.mxu0
        %v711 = vadd.f32 %v646, %v705
        %v712 = vadd.f32 %v647, %v708
        %s713 = scalar_lea.vmem %s4, 10
        %v714 = vld [vmem:[%s713] sm:$0x3]
        %v715 = vrot.slane %v598, 1
        %v716 = vrot.slane %v652, 1
        %v717 = vsel %vm527, %v715, %v716
        %v719 = vsel %vm427, %v717, 0
        %v722 = vand.u32 %v714, %v434
        %724 = vmatprep.subr.bf16.mxu0 0
        %725 = vmatpush1.bf16.msra.mxu0 0
        %726 = vmatprep.subr.bf16.mxu0 0
        %727 = vmatpush1.bf16.msra.mxu0 0
        %728 = vmatprep.subr.bf16.mxu0 0
        %729 = vmatpush1.bf16.msra.mxu0 0
        %730 = vmatprep.subr.bf16.mxu0 0
        %731 = vmatpush1.bf16.msra.mxu0 0
        %732 = vmatprep.subr.bf16.mxu0 0
        %733 = vmatpush1.bf16.msra.mxu0 0
        %734 = vmatprep.subr.bf16.mxu0 0
        %735 = vmatpush1.bf16.msra.mxu0 0
        %736 = vmatprep.subr.bf16.mxu0 0
        %737 = vmatpush1.bf16.msra.mxu0 0
        %738 = vmatprep.subr.bf16.mxu0 0
        %739 = vmatpush1.bf16.msra.mxu0 %v722
        %740 = vmatprep.subr.bf16.mxu0 0
        %741 = vmatpush2.bf16.msra.mxu0 0
        %742 = vmatprep.subr.bf16.mxu0 0
        %743 = vmatpush2.bf16.msra.mxu0 0
        %744 = vmatprep.subr.bf16.mxu0 0
        %745 = vmatpush2.bf16.msra.mxu0 0
        %746 = vmatprep.subr.bf16.mxu0 0
        %747 = vmatpush2.bf16.msra.mxu0 0
        %748 = vmatprep.subr.bf16.mxu0 0
        %749 = vmatpush2.bf16.msra.mxu0 0
        %750 = vmatprep.subr.bf16.mxu0 0
        %751 = vmatpush2.bf16.msra.mxu0 0
        %752 = vmatprep.subr.bf16.mxu0 0
        %753 = vmatpush2.bf16.msra.mxu0 0
        %754 = vmatprep.subr.bf16.mxu0 0
        %755 = vmatpush2.bf16.msra.mxu0 0
        %756 = vmatprep.mubr.bf16.mxu0 0
        %757 = vmatmul.mubr.bf16.gmra.mxu0 %v719
        %v758 = vpop.f32.mrf.mxu0
        %v759 = vadd.f32 0.0, %v758
        %v760 = vpop.f32.mrf.mxu0
        %v761 = vpop.f32.mrf.mxu0
        %v762 = vadd.f32 0.0, %v761
        %v763 = vpop.f32.mrf.mxu0
        %764 = vdwg.mxu0
        %v765 = vadd.f32 %v711, %v759
        %v766 = vadd.f32 %v712, %v762
        %v767 = vld [vmem:[%s372] sm:$0xf]
        %v768 = vld [vmem:[%s372 + $0x4] sm:$0xf]
        %v769 = vld [vmem:[%s372 + $0x8] sm:$0x1]
        %vm770 = vcmp.ge.bf16.partialorder %v767, 0
        %vm771 = vcmp.ge.bf16.partialorder %v768, 0
        %vm772 = vcmp.ge.bf16.partialorder %v769, 0
        %v773 = vmul.bf16 %v395, %v767
        %v774 = vmul.bf16 %v395, %v768
        %v775 = vmul.bf16 %v395, %v769
        %v776 = vsel %vm770, %v767, %v773
        %v777 = vsel %vm771, %v768, %v774
        %v778 = vsel %vm772, %v769, %v775
        %s779 = scalar_lea.vmem %s4, 12
        %v780 = vld [vmem:[%s779] sm:$0x3]
        %v783 = vunpack.c.l.b16 %v776
        %v784 = vunpack.c.l.b16 %v777
        %v785 = vpack.c.b16 %v784, %v783
        %v787 = vsel %vm427, %v785, 0
        %v790 = vand.u32 %v780, %v434
        %792 = vmatprep.subr.bf16.mxu0 0
        %793 = vmatpush1.bf16.msra.mxu0 0
        %794 = vmatprep.subr.bf16.mxu0 0
        %795 = vmatpush1.bf16.msra.mxu0 0
        %796 = vmatprep.subr.bf16.mxu0 0
        %797 = vmatpush1.bf16.msra.mxu0 0
        %798 = vmatprep.subr.bf16.mxu0 0
        %799 = vmatpush1.bf16.msra.mxu0 0
        %800 = vmatprep.subr.bf16.mxu0 0
        %801 = vmatpush1.bf16.msra.mxu0 0
        %802 = vmatprep.subr.bf16.mxu0 0
        %803 = vmatpush1.bf16.msra.mxu0 0
        %804 = vmatprep.subr.bf16.mxu0 0
        %805 = vmatpush1.bf16.msra.mxu0 0
        %806 = vmatprep.subr.bf16.mxu0 0
        %807 = vmatpush1.bf16.msra.mxu0 %v790
        %808 = vmatprep.subr.bf16.mxu0 0
        %809 = vmatpush2.bf16.msra.mxu0 0
        %810 = vmatprep.subr.bf16.mxu0 0
        %811 = vmatpush2.bf16.msra.mxu0 0
        %812 = vmatprep.subr.bf16.mxu0 0
        %813 = vmatpush2.bf16.msra.mxu0 0
        %814 = vmatprep.subr.bf16.mxu0 0
        %815 = vmatpush2.bf16.msra.mxu0 0
        %816 = vmatprep.subr.bf16.mxu0 0
        %817 = vmatpush2.bf16.msra.mxu0 0
        %818 = vmatprep.subr.bf16.mxu0 0
        %819 = vmatpush2.bf16.msra.mxu0 0
        %820 = vmatprep.subr.bf16.mxu0 0
        %821 = vmatpush2.bf16.msra.mxu0 0
        %822 = vmatprep.subr.bf16.mxu0 0
        %823 = vmatpush2.bf16.msra.mxu0 0
        %824 = vmatprep.mubr.bf16.mxu0 0
        %825 = vmatmul.mubr.bf16.gmra.mxu0 %v787
        %v826 = vpop.f32.mrf.mxu0
        %v827 = vadd.f32 0.0, %v826
        %v828 = vpop.f32.mrf.mxu0
        %v829 = vpop.f32.mrf.mxu0
        %v830 = vadd.f32 0.0, %v829
        %v831 = vpop.f32.mrf.mxu0
        %832 = vdwg.mxu0
        %v833 = vadd.f32 %v765, %v827
        %v834 = vadd.f32 %v766, %v830
        %s835 = scalar_lea.vmem %s4, 14
        %v836 = vld [vmem:[%s835] sm:$0x3]
        %v838 = vunpack.c.l.b16 %v778
        %v839 = vpack.c.b16 %v838, %v838
        %v840 = vshrl.u32 %v785, 16
        %v842 = vshll.u32 %v785, 16
        %v844 = vrot.slane %v842, 1
        %v845 = vor.u32 %v840, %v844
        %v847 = vshll.u32 %v839, 16
        %v849 = vrot.slane %v847, 1
        %v850 = vsel %vm414, %v845, %v849
        %v852 = vsel %vm427, %v850, 0
        %v855 = vand.u32 %v836, %v434
        %857 = vmatprep.subr.bf16.mxu0 0
        %858 = vmatpush1.bf16.msra.mxu0 0
        %859 = vmatprep.subr.bf16.mxu0 0
        %860 = vmatpush1.bf16.msra.mxu0 0
        %861 = vmatprep.subr.bf16.mxu0 0
        %862 = vmatpush1.bf16.msra.mxu0 0
        %863 = vmatprep.subr.bf16.mxu0 0
        %864 = vmatpush1.bf16.msra.mxu0 0
        %865 = vmatprep.subr.bf16.mxu0 0
        %866 = vmatpush1.bf16.msra.mxu0 0
        %867 = vmatprep.subr.bf16.mxu0 0
        %868 = vmatpush1.bf16.msra.mxu0 0
        %869 = vmatprep.subr.bf16.mxu0 0
        %870 = vmatpush1.bf16.msra.mxu0 0
        %871 = vmatprep.subr.bf16.mxu0 0
        %872 = vmatpush1.bf16.msra.mxu0 %v855
        %873 = vmatprep.subr.bf16.mxu0 0
        %874 = vmatpush2.bf16.msra.mxu0 0
        %875 = vmatprep.subr.bf16.mxu0 0
        %876 = vmatpush2.bf16.msra.mxu0 0
        %877 = vmatprep.subr.bf16.mxu0 0
        %878 = vmatpush2.bf16.msra.mxu0 0
        %879 = vmatprep.subr.bf16.mxu0 0
        %880 = vmatpush2.bf16.msra.mxu0 0
        %881 = vmatprep.subr.bf16.mxu0 0
        %882 = vmatpush2.bf16.msra.mxu0 0
        %883 = vmatprep.subr.bf16.mxu0 0
        %884 = vmatpush2.bf16.msra.mxu0 0
        %885 = vmatprep.subr.bf16.mxu0 0
        %886 = vmatpush2.bf16.msra.mxu0 0
        %887 = vmatprep.subr.bf16.mxu0 0
        %888 = vmatpush2.bf16.msra.mxu0 0
        %889 = vmatprep.mubr.bf16.mxu0 0
        %890 = vmatmul.mubr.bf16.gmra.mxu0 %v852
        %v891 = vpop.f32.mrf.mxu0
        %v892 = vadd.f32 0.0, %v891
        %v893 = vpop.f32.mrf.mxu0
        %v894 = vpop.f32.mrf.mxu0
        %v895 = vadd.f32 0.0, %v894
        %v896 = vpop.f32.mrf.mxu0
        %897 = vdwg.mxu0
        %v898 = vadd.f32 %v833, %v892
        %v899 = vadd.f32 %v834, %v895
        %s900 = scalar_lea.vmem %s4, 16
        %v901 = vld [vmem:[%s900] sm:$0x3]
        %v902 = vrot.slane %v785, 1
        %v903 = vrot.slane %v839, 1
        %v904 = vsel %vm527, %v902, %v903
        %v906 = vsel %vm427, %v904, 0
        %v909 = vand.u32 %v901, %v434
        %911 = vmatprep.subr.bf16.mxu0 0
        %912 = vmatpush1.bf16.msra.mxu0 0
        %913 = vmatprep.subr.bf16.mxu0 0
        %914 = vmatpush1.bf16.msra.mxu0 0
        %915 = vmatprep.subr.bf16.mxu0 0
        %916 = vmatpush1.bf16.msra.mxu0 0
        %917 = vmatprep.subr.bf16.mxu0 0
        %918 = vmatpush1.bf16.msra.mxu0 0
        %919 = vmatprep.subr.bf16.mxu0 0
        %920 = vmatpush1.bf16.msra.mxu0 0
        %921 = vmatprep.subr.bf16.mxu0 0
        %922 = vmatpush1.bf16.msra.mxu0 0
        %923 = vmatprep.subr.bf16.mxu0 0
        %924 = vmatpush1.bf16.msra.mxu0 0
        %925 = vmatprep.subr.bf16.mxu0 0
        %926 = vmatpush1.bf16.msra.mxu0 %v909
        %927 = vmatprep.subr.bf16.mxu0 0
        %928 = vmatpush2.bf16.msra.mxu0 0
        %929 = vmatprep.subr.bf16.mxu0 0
        %930 = vmatpush2.bf16.msra.mxu0 0
        %931 = vmatprep.subr.bf16.mxu0 0
        %932 = vmatpush2.bf16.msra.mxu0 0
        %933 = vmatprep.subr.bf16.mxu0 0
        %934 = vmatpush2.bf16.msra.mxu0 0
        %935 = vmatprep.subr.bf16.mxu0 0
        %936 = vmatpush2.bf16.msra.mxu0 0
        %937 = vmatprep.subr.bf16.mxu0 0
        %938 = vmatpush2.bf16.msra.mxu0 0
        %939 = vmatprep.subr.bf16.mxu0 0
        %940 = vmatpush2.bf16.msra.mxu0 0
        %941 = vmatprep.subr.bf16.mxu0 0
        %942 = vmatpush2.bf16.msra.mxu0 0
        %943 = vmatprep.mubr.bf16.mxu0 0
        %944 = vmatmul.mubr.bf16.gmra.mxu0 %v906
        %v945 = vpop.f32.mrf.mxu0
        %v946 = vadd.f32 0.0, %v945
        %v947 = vpop.f32.mrf.mxu0
        %v948 = vpop.f32.mrf.mxu0
        %v949 = vadd.f32 0.0, %v948
        %v950 = vpop.f32.mrf.mxu0
        %951 = vdwg.mxu0
        %v952 = vadd.f32 %v898, %v946
        %v953 = vadd.f32 %v899, %v949
        %v954 = vld [vmem:[%s5] sm:$0x1]
        %v956 = vlaneseq
        %v957 = vshrl.u32 %v956, 7
        %v958 = vsub.s32 0, %v957
        %v959 = vrot.slane %v954, %v958
        %v961 = vadd.f32 %v952, %v959
        %v962 = vadd.f32 %v953, %v959
        %vm963 = vcmp.ge.f32.partialorder %v961, 0.0
        %vm964 = vcmp.ge.f32.partialorder %v962, 0.0
        %v965 = vstv %s376
        %v966 = vmul.f32 %v965, %v961
        %v967 = vmul.f32 %v965, %v962
        %v968 = vsel %vm963, %v961, %v966
        %v969 = vsel %vm964, %v962, %v967
        %v970 = vpack.c.bf16 %v969, %v968
        %v972 = vunpack.c.l.b16 %v970
        %v973 = vunpack.c.h.b16 %v970
        %v974 = vpack.c.b16 %v972, %v972
        %v975 = vpack.c.b16 %v973, %v973
        %vm978 = vcmask 257024
        %979 = vst.msk [vmem:[%s342] sm:$0xf] %vm978, %v974
        %980 = vst.msk [vmem:[%s342 + $0x4] sm:$0xf] %vm978, %v975
        %s981 = sand.u32 %s194, 1
        %s982 = scalar_lea.sflag [#allocation3], %s981
        %s983 = sand.u32 %s194, 1
        %s984 = smul.addr %s983, 8
        %s985 = scalar_lea.vmem [#allocation5], %s984
        // Predicated region
        $region49: #{conv2d_s1.1} parent=43 // pred_check
          %p986 = pneg %p204
        $region50: #{conv2d_s1.1} parent=43 // pred_check_branch
          %988 = sbr.rel (%p986) target = $region52
        $region51: #{conv2d_s1.1} parent=43 // pred_region
          %s990 = ssub.s32 128, 128
          %991 = vsyncadd %s982, %s990
          %s992 = smul.addr %s26, 2
          %s993 = smul.addr %s25, 32
          %s994 = sadd.s32 %s992, %s993
          %s995 = smul.addr %s994, 64
          %s996 = scalar_lea.hbm %s6, %s995
          %s997 = sshll.u32 %s985, 4
          %s998 = int_to_ptr.vmem [resolvable:$true] %s997
          %1003 = dma.vmem_to_hbm [thread:$0]  %s998, 128, %s996, %s982, 64, 64, 4
        $region52: #{conv2d_s1.1} parent=43 // pred_fallthru
          _
      $region44: #{conv2d_s1.1} parent=5 // pred_fallthru
        _
      %p1004 = scmp.le.s32.totalorder 2, %s16
      // Predicated region
      $region53: #{conv2d_s1.1} parent=5 // pred_check
        %p1005 = pneg %p1004
      $region54: #{conv2d_s1.1} parent=5 // pred_check_branch
        %1007 = sbr.rel (%p1005) target = $region56
      $region55: #{conv2d_s1.1} parent=5 // pred_region
        %s1008 = ssub.s32 %s16, 2
        // Predicated region
        $region57: #{conv2d_s1.1} parent=55 // pred_check
          %p1009 = pneg %p210
        $region58: #{conv2d_s1.1} parent=55 // pred_check_branch
          %1011 = sbr.rel (%p1009) target = $region60
        $region59: #{conv2d_s1.1} parent=55 // pred_region
          %s1012 = sand.u32 %s195, 1
          %s1013 = scalar_lea.sflag [#allocation3], %s1012
          %s1014 = sand.u32 %s195, 1
          %s1015 = smul.addr %s1014, 8
          %s1016 = scalar_lea.vmem [#allocation5], %s1015
          %1017 = dma.done %s1013, 128
        $region60: #{conv2d_s1.1} parent=55 // pred_fallthru
          _
      $region56: #{conv2d_s1.1} parent=5 // pred_fallthru
        _
    $region6: #{conv2d_s1.1} parent=1 // loop_footer
      %s20 = sadd.s32 1, %s16
    $region7: #{conv2d_s1.1} parent=1 // loop_footer_branch
      %15 = sbr.rel target = $region3
    $region8: #{conv2d_s1.1} parent=1 // loop_exit
      _
    %1018 = vsyncpa [#allocation3], 1
    %s1019 = scalar_lea.sflag [#allocation3], 1
    %1020 = vsyncpa %s1019, 1
    %1021 = vsyncpa [#allocation4], 1
    %s1022 = scalar_lea.sflag [#allocation4], 1
    %1023 = vsyncpa %s1022, 1

</llo_original>
